<compile_context>
chip_gen: v7x
topology: tpu7x:2x2x1
jax: 0.10.0
libtpu: 0.0.40
codegen_flags: <defaults>
</compile_context>

<pallas_src>
import jax
import jax.numpy as jnp
from jax.experimental import pallas as pl
from jax.experimental.pallas import tpu as pltpu


# (in_features, out_features) of the torch.nn.Sequential layers.
_LAYER_DIMS = [(3, 128), (128, 64), (64, 128), (128, 3)]


def _round_up(n, m):
    return ((n + m - 1) // m) * m


def _mlp_kernel(x_ref, w1_ref, b1_ref, w2_ref, b2_ref,
                w3_ref, b3_ref, w4_ref, b4_ref, o_ref):
    """Feature-major fused MLP: activations are (features, tn), batch on lanes.

    All four layers run on the MXU with f32 accumulation.  The MXU is ~90%
    idle at these shapes, so the K=3 first layer is effectively free there and
    the VALU slot only carries bias-add + ReLU + the final store.
    """
    mxu_dt = w2_ref.dtype
    to_mxu = lambda v: v if v.dtype == mxu_dt else v.astype(mxu_dt)

    # Layer 1: 3 -> 128 (K=3 pad on the MXU is free; keeps VALU clear).
    h = jnp.dot(w1_ref[...], to_mxu(x_ref[...]),
                preferred_element_type=jnp.float32)
    h = jnp.maximum(h + b1_ref[...], 0.0)                 # (128, tn) f32

    # Layer 2: 128 -> 64
    h = jnp.dot(w2_ref[...], to_mxu(h), preferred_element_type=jnp.float32)
    h = jnp.maximum(h + b2_ref[...], 0.0)                 # (64, tn)

    # Layer 3: 64 -> 128
    h = jnp.dot(w3_ref[...], to_mxu(h), preferred_element_type=jnp.float32)
    h = jnp.maximum(h + b3_ref[...], 0.0)                 # (128, tn)

    # Layer 4: 128 -> 3
    h = jnp.dot(w4_ref[...], to_mxu(h), preferred_element_type=jnp.float32)
    o_ref[...] = (h + b4_ref[...]).astype(o_ref.dtype)    # (3, tn) lane-dense


def _pick_batch_tile(N, tm):
    """Lane-tile for the batch axis: large (amortize grid-step overhead), but
    always >= 2 grid steps when N > 128 so v7x megacore gets work on both TCs."""
    tm = max(128, _round_up(tm, 128))
    if N <= 128:
        return 128                                    # single (possibly ragged) block
    return min(tm, _round_up(-(-N // 2), 128))        # ceil(N/2) rounded to lanes


def lorenz_mlp_forward_t(xT, params, *, tm=1024, mxu_dtype=jnp.float32):
    """Feature-major forward: xT is (3, N) f32, returns (3, N) f32.

    Use this directly inside ODE time-stepping loops (state kept feature-major)
    to avoid the per-call transpose HBM passes of the (N, 3) wrapper."""
    F, N = xT.shape
    assert F == 3
    xT = xT.astype(jnp.float32)

    tn = _pick_batch_tile(N, tm)
    grid = (pl.cdiv(N, tn),)    # ragged final block handled by Pallas, no padding

    # Weights stay in PyTorch (out, in) layout; the kernel computes W @ x^T.
    w1 = params["w1"].astype(mxu_dtype)                   # (128, 3)
    w2 = params["w2"].astype(mxu_dtype)                   # (64, 128)
    w3 = params["w3"].astype(mxu_dtype)                   # (128, 64)
    w4 = params["w4"].astype(mxu_dtype)                   # (3, 128)
    b1 = params["b1"].reshape(-1, 1).astype(jnp.float32)  # (128, 1)
    b2 = params["b2"].reshape(-1, 1).astype(jnp.float32)  # (64, 1)
    b3 = params["b3"].reshape(-1, 1).astype(jnp.float32)  # (128, 1)
    b4 = params["b4"].reshape(-1, 1).astype(jnp.float32)  # (3, 1)

    resident = lambda i: (0, 0)   # weights/biases pinned across all batch tiles

    grid_spec = pltpu.PrefetchScalarGridSpec(
        num_scalar_prefetch=0,
        grid=grid,
        in_specs=[
            pl.BlockSpec((3, tn), lambda i: (0, i)),          # x^T batch tile
            pl.BlockSpec(w1.shape, resident), pl.BlockSpec(b1.shape, resident),
            pl.BlockSpec(w2.shape, resident), pl.BlockSpec(b2.shape, resident),
            pl.BlockSpec(w3.shape, resident), pl.BlockSpec(b3.shape, resident),
            pl.BlockSpec(w4.shape, resident), pl.BlockSpec(b4.shape, resident),
        ],
        out_specs=pl.BlockSpec((3, tn), lambda i: (0, i)),
    )

    flops = 2 * N * sum(fi * fo for fi, fo in _LAYER_DIMS)
    param_bytes = sum(int(a.size) * a.dtype.itemsize
                      for a in (w1, w2, w3, w4, b1, b2, b3, b4))
    bytes_accessed = 2 * N * 3 * 4 + param_bytes

    return pl.pallas_call(
        _mlp_kernel,
        out_shape=jax.ShapeDtypeStruct((3, N), jnp.float32),
        grid_spec=grid_spec,
        compiler_params=pltpu.CompilerParams(
            dimension_semantics=("parallel",)),   # megacore-shard batch tiles (v7x)
        cost_estimate=pl.CostEstimate(
            flops=flops, transcendentals=0, bytes_accessed=bytes_accessed),
    )(xT, w1, b1, w2, b2, w3, b3, w4, b4)


def lorenz_mlp_forward(x, params, *, tm=1024, mxu_dtype=jnp.float32):
    """Drop-in equivalent of the PyTorch module's forward: x (N, 3) -> (N, 3)."""
    N, F = x.shape
    assert F == 3
    outT = lorenz_mlp_forward_t(jnp.transpose(x), params,
                                tm=tm, mxu_dtype=mxu_dtype)
    return jnp.transpose(outT)


def init_params(seed=0):
    """PyTorch-Linear-style init: U(-1/sqrt(fan_in), 1/sqrt(fan_in)),
    weights stored in PyTorch (out_features, in_features) layout."""
    key = jax.random.PRNGKey(seed)
    params = {}
    for idx, (fin, fout) in enumerate(_LAYER_DIMS, start=1):
        key, kw, kb = jax.random.split(key, 3)
        bound = 1.0 / (fin ** 0.5)
        params[f"w{idx}"] = jax.random.uniform(
            kw, (fout, fin), jnp.float32, minval=-bound, maxval=bound)
        params[f"b{idx}"] = jax.random.uniform(
            kb, (fout,), jnp.float32, minval=-bound, maxval=bound)
    return params


def _reference_forward(x, params):
    h = jnp.maximum(x @ params["w1"].T + params["b1"], 0.0)
    h = jnp.maximum(h @ params["w2"].T + params["b2"], 0.0)
    h = jnp.maximum(h @ params["w3"].T + params["b3"], 0.0)
    return h @ params["w4"].T + params["b4"]


if __name__ == "__main__":
    params = init_params(seed=0)

    # Deterministic batch of Lorenz states (x, y, z).
    N = 256
    x = jax.random.normal(jax.random.PRNGKey(0), (N, 3), jnp.float32) * 10.0
    ref = _reference_forward(x, params)

    # --- f32 path (module semantics), (N, 3) PyTorch-layout wrapper.
    out = jax.block_until_ready(lorenz_mlp_forward(x, params))
    assert out.shape == (N, 3) and out.dtype == jnp.float32
    assert jnp.allclose(out, ref, atol=1e-3, rtol=1e-3)

    # --- feature-major path (no wrapper transposes; for ODE stepping loops).
    outT = jax.block_until_ready(lorenz_mlp_forward_t(jnp.transpose(x), params))
    assert outT.shape == (3, N)
    assert jnp.allclose(jnp.transpose(outT), ref, atol=1e-3, rtol=1e-3)

    # --- ragged batches: no wrapper padding; Pallas clips the final block.
    for N2 in (300, 100):
        x2 = jax.random.normal(jax.random.PRNGKey(N2), (N2, 3), jnp.float32) * 10.0
        out2 = jax.block_until_ready(lorenz_mlp_forward(x2, params))
        ref2 = _reference_forward(x2, params)
        assert out2.shape == (N2, 3)
        assert jnp.allclose(out2, ref2, atol=1e-3, rtol=1e-3)

    # --- opt-in bf16 MXU-operand path (f32 accumulation); looser check.
    out_bf16 = jax.block_until_ready(
        lorenz_mlp_forward(x, params, mxu_dtype=jnp.bfloat16))
    rel_err = jnp.max(jnp.abs(out_bf16 - ref)) / (jnp.max(jnp.abs(ref)) + 1e-6)
    assert float(rel_err) < 0.1

    print("KERNEL_OK")
</pallas_src>

<mosaic_0001>
module attributes {stable_mosaic.version = 11 : i64} {
  func.func @_mlp_kernel(%arg0: i32, %arg1: memref<3x128xf32, #tpu.memory_space<vmem>>, %arg2: memref<128x3xf32, #tpu.memory_space<vmem>>, %arg3: memref<128x1xf32, #tpu.memory_space<vmem>>, %arg4: memref<64x128xf32, #tpu.memory_space<vmem>>, %arg5: memref<64x1xf32, #tpu.memory_space<vmem>>, %arg6: memref<128x64xf32, #tpu.memory_space<vmem>>, %arg7: memref<128x1xf32, #tpu.memory_space<vmem>>, %arg8: memref<3x128xf32, #tpu.memory_space<vmem>>, %arg9: memref<3x1xf32, #tpu.memory_space<vmem>>, %arg10: memref<3x128xf32, #tpu.memory_space<vmem>>) attributes {dimension_semantics = [#tpu.dimension_semantics<parallel>], iteration_bounds = array<i64: 2>, scalar_prefetch = 0 : i64, scratch_operands = 0 : i64, tpu.core_type = #tpu.core_type<tc>, window_params = [{transform_indices = @transform_0, window_bounds = array<i64: 3, 128>}, {pipeline_mode = #tpu.pipeline_mode<synchronous>, transform_indices = @transform_1, window_bounds = array<i64: 128, 3>}, {pipeline_mode = #tpu.pipeline_mode<synchronous>, transform_indices = @transform_2, window_bounds = array<i64: 128, 1>}, {pipeline_mode = #tpu.pipeline_mode<synchronous>, transform_indices = @transform_3, window_bounds = array<i64: 64, 128>}, {pipeline_mode = #tpu.pipeline_mode<synchronous>, transform_indices = @transform_4, window_bounds = array<i64: 64, 1>}, {pipeline_mode = #tpu.pipeline_mode<synchronous>, transform_indices = @transform_5, window_bounds = array<i64: 128, 64>}, {pipeline_mode = #tpu.pipeline_mode<synchronous>, transform_indices = @transform_6, window_bounds = array<i64: 128, 1>}, {pipeline_mode = #tpu.pipeline_mode<synchronous>, transform_indices = @transform_7, window_bounds = array<i64: 3, 128>}, {pipeline_mode = #tpu.pipeline_mode<synchronous>, transform_indices = @transform_8, window_bounds = array<i64: 3, 1>}, {transform_indices = @transform_9, window_bounds = array<i64: 3, 128>}]} {
    %c0 = arith.constant 0 : index
    %c0_0 = arith.constant 0 : index
    %0 = vector.load %arg2[%c0, %c0_0] : memref<128x3xf32, #tpu.memory_space<vmem>>, vector<128x3xf32>
    %c0_1 = arith.constant 0 : index
    %c0_2 = arith.constant 0 : index
    %1 = vector.load %arg1[%c0_1, %c0_2] : memref<3x128xf32, #tpu.memory_space<vmem>>, vector<3x128xf32>
    %cst = arith.constant dense<0.000000e+00> : vector<128x128xf32>
    %2 = tpu.matmul %0, %1, %cst {dimension_numbers = #tpu.dot_dimension_numbers<[1], [0], [0], [1], [0, 0, 1, 1], [], []>} : vector<128x3xf32>, vector<3x128xf32>, vector<128x128xf32> -> vector<128x128xf32>
    %c0_3 = arith.constant 0 : index
    %c0_4 = arith.constant 0 : index
    %3 = vector.load %arg3[%c0_3, %c0_4] : memref<128x1xf32, #tpu.memory_space<vmem>>, vector<128x1xf32>
    %4 = vector.broadcast %3 : vector<128x1xf32> to vector<128x128xf32>
    %5 = arith.addf %2, %4 : vector<128x128xf32>
    %cst_5 = arith.constant 0.000000e+00 : f32
    %6 = vector.broadcast %cst_5 : f32 to vector<128x128xf32>
    %7 = arith.maximumf %5, %6 : vector<128x128xf32>
    %c0_6 = arith.constant 0 : index
    %c0_7 = arith.constant 0 : index
    %8 = vector.load %arg4[%c0_6, %c0_7] : memref<64x128xf32, #tpu.memory_space<vmem>>, vector<64x128xf32>
    %cst_8 = arith.constant dense<0.000000e+00> : vector<64x128xf32>
    %9 = tpu.matmul %8, %7, %cst_8 {dimension_numbers = #tpu.dot_dimension_numbers<[1], [0], [0], [1], [0, 0, 1, 1], [], []>} : vector<64x128xf32>, vector<128x128xf32>, vector<64x128xf32> -> vector<64x128xf32>
    %c0_9 = arith.constant 0 : index
    %c0_10 = arith.constant 0 : index
    %10 = vector.load %arg5[%c0_9, %c0_10] : memref<64x1xf32, #tpu.memory_space<vmem>>, vector<64x1xf32>
    %11 = vector.broadcast %10 : vector<64x1xf32> to vector<64x128xf32>
    %12 = arith.addf %9, %11 : vector<64x128xf32>
    %cst_11 = arith.constant 0.000000e+00 : f32
    %13 = vector.broadcast %cst_11 : f32 to vector<64x128xf32>
    %14 = arith.maximumf %12, %13 : vector<64x128xf32>
    %c0_12 = arith.constant 0 : index
    %c0_13 = arith.constant 0 : index
    %15 = vector.load %arg6[%c0_12, %c0_13] : memref<128x64xf32, #tpu.memory_space<vmem>>, vector<128x64xf32>
    %cst_14 = arith.constant dense<0.000000e+00> : vector<128x128xf32>
    %16 = tpu.matmul %15, %14, %cst_14 {dimension_numbers = #tpu.dot_dimension_numbers<[1], [0], [0], [1], [0, 0, 1, 1], [], []>} : vector<128x64xf32>, vector<64x128xf32>, vector<128x128xf32> -> vector<128x128xf32>
    %c0_15 = arith.constant 0 : index
    %c0_16 = arith.constant 0 : index
    %17 = vector.load %arg7[%c0_15, %c0_16] : memref<128x1xf32, #tpu.memory_space<vmem>>, vector<128x1xf32>
    %18 = vector.broadcast %17 : vector<128x1xf32> to vector<128x128xf32>
    %19 = arith.addf %16, %18 : vector<128x128xf32>
    %cst_17 = arith.constant 0.000000e+00 : f32
    %20 = vector.broadcast %cst_17 : f32 to vector<128x128xf32>
    %21 = arith.maximumf %19, %20 : vector<128x128xf32>
    %c0_18 = arith.constant 0 : index
    %c0_19 = arith.constant 0 : index
    %22 = vector.load %arg8[%c0_18, %c0_19] : memref<3x128xf32, #tpu.memory_space<vmem>>, vector<3x128xf32>
    %cst_20 = arith.constant dense<0.000000e+00> : vector<3x128xf32>
    %23 = tpu.matmul %22, %21, %cst_20 {dimension_numbers = #tpu.dot_dimension_numbers<[1], [0], [0], [1], [0, 0, 1, 1], [], []>} : vector<3x128xf32>, vector<128x128xf32>, vector<3x128xf32> -> vector<3x128xf32>
    %c0_21 = arith.constant 0 : index
    %c0_22 = arith.constant 0 : index
    %24 = vector.load %arg9[%c0_21, %c0_22] : memref<3x1xf32, #tpu.memory_space<vmem>>, vector<3x1xf32>
    %25 = vector.broadcast %24 : vector<3x1xf32> to vector<3x128xf32>
    %26 = arith.addf %23, %25 : vector<3x128xf32>
    %c0_23 = arith.constant 0 : index
    %c0_24 = arith.constant 0 : index
    %27 = vector.load %arg10[%c0_23, %c0_24] : memref<3x128xf32, #tpu.memory_space<vmem>>, vector<3x128xf32>
    tpu.vector_store %arg10[%c0_23, %c0_24], %26 {strides = array<i32>} : memref<3x128xf32, #tpu.memory_space<vmem>>, vector<3x128xf32>,
    return
  }
  func.func @transform_0(%arg0: i32) -> (i32, i32) {
    %c0_i32 = arith.constant 0 : i32
    %c0_i32_0 = arith.constant 0 : i32
    return %c0_i32, %arg0 : i32, i32
  }
  func.func @transform_1(%arg0: i32) -> (i32, i32) {
    %c0_i32 = arith.constant 0 : i32
    %c0_i32_0 = arith.constant 0 : i32
    %c0_i32_1 = arith.constant 0 : i32
    return %c0_i32, %c0_i32_0 : i32, i32
  }
  func.func @transform_2(%arg0: i32) -> (i32, i32) {
    %c0_i32 = arith.constant 0 : i32
    %c0_i32_0 = arith.constant 0 : i32
    %c0_i32_1 = arith.constant 0 : i32
    return %c0_i32, %c0_i32_0 : i32, i32
  }
  func.func @transform_3(%arg0: i32) -> (i32, i32) {
    %c0_i32 = arith.constant 0 : i32
    %c0_i32_0 = arith.constant 0 : i32
    %c0_i32_1 = arith.constant 0 : i32
    return %c0_i32, %c0_i32_0 : i32, i32
  }
  func.func @transform_4(%arg0: i32) -> (i32, i32) {
    %c0_i32 = arith.constant 0 : i32
    %c0_i32_0 = arith.constant 0 : i32
    %c0_i32_1 = arith.constant 0 : i32
    return %c0_i32, %c0_i32_0 : i32, i32
  }
  func.func @transform_5(%arg0: i32) -> (i32, i32) {
    %c0_i32 = arith.constant 0 : i32
    %c0_i32_0 = arith.constant 0 : i32
    %c0_i32_1 = arith.constant 0 : i32
    return %c0_i32, %c0_i32_0 : i32, i32
  }
  func.func @transform_6(%arg0: i32) -> (i32, i32) {
    %c0_i32 = arith.constant 0 : i32
    %c0_i32_0 = arith.constant 0 : i32
    %c0_i32_1 = arith.constant 0 : i32
    return %c0_i32, %c0_i32_0 : i32, i32
  }
  func.func @transform_7(%arg0: i32) -> (i32, i32) {
    %c0_i32 = arith.constant 0 : i32
    %c0_i32_0 = arith.constant 0 : i32
    %c0_i32_1 = arith.constant 0 : i32
    return %c0_i32, %c0_i32_0 : i32, i32
  }
  func.func @transform_8(%arg0: i32) -> (i32, i32) {
    %c0_i32 = arith.constant 0 : i32
    %c0_i32_0 = arith.constant 0 : i32
    %c0_i32_1 = arith.constant 0 : i32
    return %c0_i32, %c0_i32_0 : i32, i32
  }
  func.func @transform_9(%arg0: i32) -> (i32, i32) {
    %c0_i32 = arith.constant 0 : i32
    %c0_i32_0 = arith.constant 0 : i32
    return %c0_i32, %arg0 : i32, i32
  }
}

</mosaic_0001>

<llo_original>
// kernel: tpu_custom_call.1
$region0: #{tpu_custom_call.1}
  #allocation0 [shape = 'u32[]', space=smem, size = 0x4, offset = 0x4, fixed_abs, tag = 'smem constant byte address 0x4 - core index']
  #allocation1 [shape = 'u32[144,128]{1,0:T(1,128)}', space=vmem, size = 0x12000, scoped, tag = 'internal scratch']
  %s0 = inlined_call_operand.vmem [shape: f32[3,256], index: 0, kind: input, shape index: {}]
  %s1 = inlined_call_operand.vmem [shape: f32[128,3], index: 1, kind: input, shape index: {}]
  %s2 = inlined_call_operand.vmem [shape: f32[128,1], index: 2, kind: input, shape index: {}]
  %s3 = inlined_call_operand.vmem [shape: f32[64,128], index: 3, kind: input, shape index: {}]
  %s4 = inlined_call_operand.vmem [shape: f32[64,1], index: 4, kind: input, shape index: {}]
  %s5 = inlined_call_operand.vmem [shape: f32[128,64], index: 5, kind: input, shape index: {}]
  %s6 = inlined_call_operand.vmem [shape: f32[128,1], index: 6, kind: input, shape index: {}]
  %s7 = inlined_call_operand.vmem [shape: f32[3,128], index: 7, kind: input, shape index: {}]
  %s8 = inlined_call_operand.vmem [shape: f32[3,1], index: 8, kind: input, shape index: {}]
  %s9 = inlined_call_operand.hbm [shape: f32[3,256], index: 9, kind: output, shape index: {}]
  %s10 = sld [smem:[#allocation0]]
  $region69: #{tpu_custom_call.1} parent=0
    _
  %s12 = ssub.s32 1, %s10
  %s13 = scalar_select 0, %s12, %s10
  $region1: #{tpu_custom_call.1} parent=0
    #allocation2 [shape = 'u8[4096]{0}', space=vmem, size = 0x1000, scoped, tag = 'output window, operand 0']
    #allocation3 [shape = 's32[2]{0}', space=sflag, size = 0x8, scoped, tag = 'scoped memory for tpu_custom_call.1']
    %14 = vsyncpa [#allocation3], 0
    %s15 = scalar_lea.sflag [#allocation3], 1
    %16 = vsyncpa %s15, 0
    loop: start=0, step=1, limit=4
    $region2: #{tpu_custom_call.1} parent=1 // loop_pre_header
      _
    $region3: #{tpu_custom_call.1} parent=1 // loop_header
      %s18 = sphi 0, %s22
      %p19 = scmp.ge.s32.totalorder %s18, 4
      %s28 = sphi 0, %s30
      %s31 = sphi 0, %s28
      %s32 = sphi 0, %s31
      %s48 = sphi 0, %s32
      %s52 = sphi 0, %s52
      %s54 = sphi 0, %s52
      %s55 = sphi 0, %s54
      %s69 = sphi 0, %s55
      %s73 = sphi 0, %s73
      %s75 = sphi 0, %s73
      %s76 = sphi 0, %s75
      %s90 = sphi 0, %s76
      %s94 = sphi 0, %s94
      %s96 = sphi 0, %s94
      %s97 = sphi 0, %s96
      %s111 = sphi 0, %s97
      %s115 = sphi 0, %s115
      %s117 = sphi 0, %s115
      %s118 = sphi 0, %s117
      %s132 = sphi 0, %s118
      %s136 = sphi 0, %s136
      %s138 = sphi 0, %s136
      %s139 = sphi 0, %s138
      %s153 = sphi 0, %s139
      %s157 = sphi 0, %s157
      %s159 = sphi 0, %s157
      %s160 = sphi 0, %s159
      %s174 = sphi 0, %s160
      %s178 = sphi 0, %s178
      %s180 = sphi 0, %s178
      %s181 = sphi 0, %s180
      %s195 = sphi 0, %s181
      %s199 = sphi 0, %s199
      %s201 = sphi 0, %s199
      %s202 = sphi 0, %s201
      %s216 = sphi 0, %s202
      %s222 = sphi 0, %s224
      %s225 = sphi 0, %s222
      %s226 = sphi 0, %s225
      %s242 = sphi 0, %s226
    $region4: #{tpu_custom_call.1} parent=1 // loop_header_branch
      %21 = sbr.rel (%p19) target = $region8
    $region5: #{tpu_custom_call.1} parent=1 // loop_body
      %s23 = ssub.s32 %s18, 1
      %s24 = ssub.s32 %s18, 2
      %s25 = sadd.s32 %s18, 1
      %s26 = ssub.s32 %s18, %s25
      %p27 = scmp.eq.s32.totalorder %s26, 0
      %s29 = sadd.s32 %s28, 1
      %s30 = scalar_select %p27, %s28, %s29
      %p33 = pneg %p27
      %p34 = scmp.eq.s32.totalorder %s18, 1
      %p35 = por %p33, %p34
      %p36 = scmp.ne.s32.totalorder %s28, %s31
      %p37 = scmp.eq.s32.totalorder %s18, 0
      %p38 = por %p36, %p37
      %p39 = scmp.ne.s32.totalorder %s28, %s31
      %p40 = scmp.eq.s32.totalorder %s23, 1
      %p41 = por %p39, %p40
      %p42 = scmp.ne.s32.totalorder %s31, %s32
      %p43 = scmp.eq.s32.totalorder %s23, 0
      %p44 = por %p42, %p43
      %p45 = scmp.ne.s32.totalorder %s31, %s32
      %p46 = scmp.eq.s32.totalorder %s24, 1
      %p47 = por %p45, %p46
      %p49 = scmp.ne.s32.totalorder %s32, %s48
      %p50 = scmp.eq.s32.totalorder %s24, 0
      %p51 = por %p49, %p50
      %s53 = sadd.s32 %s52, 1
      %p56 = scmp.eq.s32.totalorder %s18, 1
      %p57 = scmp.ne.s32.totalorder %s52, %s54
      %p58 = scmp.eq.s32.totalorder %s18, 0
      %p59 = por %p57, %p58
      %p60 = scmp.ne.s32.totalorder %s52, %s54
      %p61 = scmp.eq.s32.totalorder %s23, 1
      %p62 = por %p60, %p61
      %p63 = scmp.ne.s32.totalorder %s54, %s55
      %p64 = scmp.eq.s32.totalorder %s23, 0
      %p65 = por %p63, %p64
      %p66 = scmp.ne.s32.totalorder %s54, %s55
      %p67 = scmp.eq.s32.totalorder %s24, 1
      %p68 = por %p66, %p67
      %p70 = scmp.ne.s32.totalorder %s55, %s69
      %p71 = scmp.eq.s32.totalorder %s24, 0
      %p72 = por %p70, %p71
      %s74 = sadd.s32 %s73, 1
      %p77 = scmp.eq.s32.totalorder %s18, 1
      %p78 = scmp.ne.s32.totalorder %s73, %s75
      %p79 = scmp.eq.s32.totalorder %s18, 0
      %p80 = por %p78, %p79
      %p81 = scmp.ne.s32.totalorder %s73, %s75
      %p82 = scmp.eq.s32.totalorder %s23, 1
      %p83 = por %p81, %p82
      %p84 = scmp.ne.s32.totalorder %s75, %s76
      %p85 = scmp.eq.s32.totalorder %s23, 0
      %p86 = por %p84, %p85
      %p87 = scmp.ne.s32.totalorder %s75, %s76
      %p88 = scmp.eq.s32.totalorder %s24, 1
      %p89 = por %p87, %p88
      %p91 = scmp.ne.s32.totalorder %s76, %s90
      %p92 = scmp.eq.s32.totalorder %s24, 0
      %p93 = por %p91, %p92
      %s95 = sadd.s32 %s94, 1
      %p98 = scmp.eq.s32.totalorder %s18, 1
      %p99 = scmp.ne.s32.totalorder %s94, %s96
      %p100 = scmp.eq.s32.totalorder %s18, 0
      %p101 = por %p99, %p100
      %p102 = scmp.ne.s32.totalorder %s94, %s96
      %p103 = scmp.eq.s32.totalorder %s23, 1
      %p104 = por %p102, %p103
      %p105 = scmp.ne.s32.totalorder %s96, %s97
      %p106 = scmp.eq.s32.totalorder %s23, 0
      %p107 = por %p105, %p106
      %p108 = scmp.ne.s32.totalorder %s96, %s97
      %p109 = scmp.eq.s32.totalorder %s24, 1
      %p110 = por %p108, %p109
      %p112 = scmp.ne.s32.totalorder %s97, %s111
      %p113 = scmp.eq.s32.totalorder %s24, 0
      %p114 = por %p112, %p113
      %s116 = sadd.s32 %s115, 1
      %p119 = scmp.eq.s32.totalorder %s18, 1
      %p120 = scmp.ne.s32.totalorder %s115, %s117
      %p121 = scmp.eq.s32.totalorder %s18, 0
      %p122 = por %p120, %p121
      %p123 = scmp.ne.s32.totalorder %s115, %s117
      %p124 = scmp.eq.s32.totalorder %s23, 1
      %p125 = por %p123, %p124
      %p126 = scmp.ne.s32.totalorder %s117, %s118
      %p127 = scmp.eq.s32.totalorder %s23, 0
      %p128 = por %p126, %p127
      %p129 = scmp.ne.s32.totalorder %s117, %s118
      %p130 = scmp.eq.s32.totalorder %s24, 1
      %p131 = por %p129, %p130
      %p133 = scmp.ne.s32.totalorder %s118, %s132
      %p134 = scmp.eq.s32.totalorder %s24, 0
      %p135 = por %p133, %p134
      %s137 = sadd.s32 %s136, 1
      %p140 = scmp.eq.s32.totalorder %s18, 1
      %p141 = scmp.ne.s32.totalorder %s136, %s138
      %p142 = scmp.eq.s32.totalorder %s18, 0
      %p143 = por %p141, %p142
      %p144 = scmp.ne.s32.totalorder %s136, %s138
      %p145 = scmp.eq.s32.totalorder %s23, 1
      %p146 = por %p144, %p145
      %p147 = scmp.ne.s32.totalorder %s138, %s139
      %p148 = scmp.eq.s32.totalorder %s23, 0
      %p149 = por %p147, %p148
      %p150 = scmp.ne.s32.totalorder %s138, %s139
      %p151 = scmp.eq.s32.totalorder %s24, 1
      %p152 = por %p150, %p151
      %p154 = scmp.ne.s32.totalorder %s139, %s153
      %p155 = scmp.eq.s32.totalorder %s24, 0
      %p156 = por %p154, %p155
      %s158 = sadd.s32 %s157, 1
      %p161 = scmp.eq.s32.totalorder %s18, 1
      %p162 = scmp.ne.s32.totalorder %s157, %s159
      %p163 = scmp.eq.s32.totalorder %s18, 0
      %p164 = por %p162, %p163
      %p165 = scmp.ne.s32.totalorder %s157, %s159
      %p166 = scmp.eq.s32.totalorder %s23, 1
      %p167 = por %p165, %p166
      %p168 = scmp.ne.s32.totalorder %s159, %s160
      %p169 = scmp.eq.s32.totalorder %s23, 0
      %p170 = por %p168, %p169
      %p171 = scmp.ne.s32.totalorder %s159, %s160
      %p172 = scmp.eq.s32.totalorder %s24, 1
      %p173 = por %p171, %p172
      %p175 = scmp.ne.s32.totalorder %s160, %s174
      %p176 = scmp.eq.s32.totalorder %s24, 0
      %p177 = por %p175, %p176
      %s179 = sadd.s32 %s178, 1
      %p182 = scmp.eq.s32.totalorder %s18, 1
      %p183 = scmp.ne.s32.totalorder %s178, %s180
      %p184 = scmp.eq.s32.totalorder %s18, 0
      %p185 = por %p183, %p184
      %p186 = scmp.ne.s32.totalorder %s178, %s180
      %p187 = scmp.eq.s32.totalorder %s23, 1
      %p188 = por %p186, %p187
      %p189 = scmp.ne.s32.totalorder %s180, %s181
      %p190 = scmp.eq.s32.totalorder %s23, 0
      %p191 = por %p189, %p190
      %p192 = scmp.ne.s32.totalorder %s180, %s181
      %p193 = scmp.eq.s32.totalorder %s24, 1
      %p194 = por %p192, %p193
      %p196 = scmp.ne.s32.totalorder %s181, %s195
      %p197 = scmp.eq.s32.totalorder %s24, 0
      %p198 = por %p196, %p197
      %s200 = sadd.s32 %s199, 1
      %p203 = scmp.eq.s32.totalorder %s18, 1
      %p204 = scmp.ne.s32.totalorder %s199, %s201
      %p205 = scmp.eq.s32.totalorder %s18, 0
      %p206 = por %p204, %p205
      %p207 = scmp.ne.s32.totalorder %s199, %s201
      %p208 = scmp.eq.s32.totalorder %s23, 1
      %p209 = por %p207, %p208
      %p210 = scmp.ne.s32.totalorder %s201, %s202
      %p211 = scmp.eq.s32.totalorder %s23, 0
      %p212 = por %p210, %p211
      %p213 = scmp.ne.s32.totalorder %s201, %s202
      %p214 = scmp.eq.s32.totalorder %s24, 1
      %p215 = por %p213, %p214
      %p217 = scmp.ne.s32.totalorder %s202, %s216
      %p218 = scmp.eq.s32.totalorder %s24, 0
      %p219 = por %p217, %p218
      %s220 = ssub.s32 %s18, %s25
      %p221 = scmp.eq.s32.totalorder %s220, 0
      %s223 = sadd.s32 %s222, 1
      %s224 = scalar_select %p221, %s222, %s223
      %p227 = pneg %p221
      %p228 = scmp.eq.s32.totalorder %s18, 1
      %p229 = por %p227, %p228
      %p230 = scmp.ne.s32.totalorder %s222, %s225
      %p231 = scmp.eq.s32.totalorder %s18, 0
      %p232 = por %p230, %p231
      %p233 = scmp.ne.s32.totalorder %s222, %s225
      %p234 = scmp.eq.s32.totalorder %s23, 1
      %p235 = por %p233, %p234
      %p236 = scmp.ne.s32.totalorder %s225, %s226
      %p237 = scmp.eq.s32.totalorder %s23, 0
      %p238 = por %p236, %p237
      %p239 = scmp.ne.s32.totalorder %s225, %s226
      %p240 = scmp.eq.s32.totalorder %s24, 1
      %p241 = por %p239, %p240
      %p243 = scmp.ne.s32.totalorder %s226, %s242
      %p244 = scmp.eq.s32.totalorder %s24, 0
      %p245 = por %p243, %p244
      %p246 = scmp.le.s32.totalorder 1, %s18
      %p247 = scmp.lt.s32.totalorder %s18, 3
      %p248 = pnand %p246, %p247
      %p249 = pneg %p248
      // Predicated region
      $region9: #{tpu_custom_call.1} parent=5 // pred_check
        _
      $region10: #{tpu_custom_call.1} parent=5 // pred_check_branch
        %251 = sbr.rel (%p248) target = $region12
      $region11: #{tpu_custom_call.1} parent=5 // pred_region
        %s252 = ssub.s32 %s18, 1
        // Predicated region
        $region13: #{tpu_custom_call.1} parent=11 // pred_check
          %p253 = pneg %p65
        $region14: #{tpu_custom_call.1} parent=11 // pred_check_branch
          %255 = sbr.rel (%p253) target = $region16
        $region15: #{tpu_custom_call.1} parent=11 // pred_region
          _
        $region16: #{tpu_custom_call.1} parent=11 // pred_fallthru
          _
        // Predicated region
        $region17: #{tpu_custom_call.1} parent=11 // pred_check
          %p256 = pneg %p86
        $region18: #{tpu_custom_call.1} parent=11 // pred_check_branch
          %258 = sbr.rel (%p256) target = $region20
        $region19: #{tpu_custom_call.1} parent=11 // pred_region
          _
        $region20: #{tpu_custom_call.1} parent=11 // pred_fallthru
          _
        // Predicated region
        $region21: #{tpu_custom_call.1} parent=11 // pred_check
          %p259 = pneg %p107
        $region22: #{tpu_custom_call.1} parent=11 // pred_check_branch
          %261 = sbr.rel (%p259) target = $region24
        $region23: #{tpu_custom_call.1} parent=11 // pred_region
          _
        $region24: #{tpu_custom_call.1} parent=11 // pred_fallthru
          _
        // Predicated region
        $region25: #{tpu_custom_call.1} parent=11 // pred_check
          %p262 = pneg %p128
        $region26: #{tpu_custom_call.1} parent=11 // pred_check_branch
          %264 = sbr.rel (%p262) target = $region28
        $region27: #{tpu_custom_call.1} parent=11 // pred_region
          _
        $region28: #{tpu_custom_call.1} parent=11 // pred_fallthru
          _
        // Predicated region
        $region29: #{tpu_custom_call.1} parent=11 // pred_check
          %p265 = pneg %p149
        $region30: #{tpu_custom_call.1} parent=11 // pred_check_branch
          %267 = sbr.rel (%p265) target = $region32
        $region31: #{tpu_custom_call.1} parent=11 // pred_region
          _
        $region32: #{tpu_custom_call.1} parent=11 // pred_fallthru
          _
        // Predicated region
        $region33: #{tpu_custom_call.1} parent=11 // pred_check
          %p268 = pneg %p170
        $region34: #{tpu_custom_call.1} parent=11 // pred_check_branch
          %270 = sbr.rel (%p268) target = $region36
        $region35: #{tpu_custom_call.1} parent=11 // pred_region
          _
        $region36: #{tpu_custom_call.1} parent=11 // pred_fallthru
          _
        // Predicated region
        $region37: #{tpu_custom_call.1} parent=11 // pred_check
          %p271 = pneg %p191
        $region38: #{tpu_custom_call.1} parent=11 // pred_check_branch
          %273 = sbr.rel (%p271) target = $region40
        $region39: #{tpu_custom_call.1} parent=11 // pred_region
          _
        $region40: #{tpu_custom_call.1} parent=11 // pred_fallthru
          _
        // Predicated region
        $region41: #{tpu_custom_call.1} parent=11 // pred_check
          %p274 = pneg %p212
        $region42: #{tpu_custom_call.1} parent=11 // pred_check_branch
          %276 = sbr.rel (%p274) target = $region44
        $region43: #{tpu_custom_call.1} parent=11 // pred_region
          _
        $region44: #{tpu_custom_call.1} parent=11 // pred_fallthru
          _
      $region12: #{tpu_custom_call.1} parent=5 // pred_fallthru
        _
      %p277 = scmp.lt.s32.totalorder %s18, 2
      // Predicated region
      $region45: #{tpu_custom_call.1} parent=5 // pred_check
        %p278 = pneg %p277
      $region46: #{tpu_custom_call.1} parent=5 // pred_check_branch
        %280 = sbr.rel (%p278) target = $region48
      $region47: #{tpu_custom_call.1} parent=5 // pred_region
        // Predicated region
        $region49: #{tpu_custom_call.1} parent=47 // pred_check
          %p281 = pneg %p38
        $region50: #{tpu_custom_call.1} parent=47 // pred_check_branch
          %283 = sbr.rel (%p281) target = $region52
        $region51: #{tpu_custom_call.1} parent=47 // pred_region
          %p284 = scmp.lt.s32.totalorder %s18, 1
          %s285 = scalar_select %p284, %s18, 1
          %s286 = smul.addr %s285, 4
          %s287 = scalar_lea.vmem %s0, %s286
        $region52: #{tpu_custom_call.1} parent=47 // pred_fallthru
          _
      $region48: #{tpu_custom_call.1} parent=5 // pred_fallthru
        _
      %p288 = scmp.le.s32.totalorder 1, %s18
      %p289 = scmp.lt.s32.totalorder %s18, 3
      %p290 = pnand %p288, %p289
      %p291 = pneg %p290
      // Predicated region
      $region53: #{tpu_custom_call.1} parent=5 // pred_check
        _
      $region54: #{tpu_custom_call.1} parent=5 // pred_check_branch
        %293 = sbr.rel (%p290) target = $region56
      $region55: #{tpu_custom_call.1} parent=5 // pred_region
        %s294 = ssub.s32 %s18, 1
        %p295 = scmp.lt.s32.totalorder %s23, 1
        %s296 = scalar_select %p295, %s23, 1
        %s297 = smul.addr %s296, 4
        %s298 = scalar_lea.vmem %s0, %s297
        %p299 = pneg %p44
        %p300 = pneg %p41
        %p301 = pneg %p65
        %p302 = pneg %p62
        %p303 = pneg %p86
        %p304 = pneg %p83
        %p305 = pneg %p107
        %p306 = pneg %p104
        %p307 = pneg %p128
        %p308 = pneg %p125
        %p309 = pneg %p149
        %p310 = pneg %p146
        %p311 = pneg %p170
        %p312 = pneg %p167
        %p313 = pneg %p191
        %p314 = pneg %p188
        %p315 = pneg %p212
        %p316 = pneg %p209
        %p317 = pneg %p238
        %p318 = pneg %p235
        %s319 = sand.u32 %s225, 1
        %s320 = scalar_lea.sflag [#allocation3], %s319
        %s321 = sand.u32 %s225, 1
        %s322 = smul.addr %s321, 4
        %s323 = scalar_lea.vmem [#allocation2], %s322
        %p324 = scmp.lt.s32.totalorder %s23, 1
        %s325 = scalar_select %p324, %s23, 1
        %s326 = smul.addr %s325, 4
        %s327 = scalar_lea.vmem %s0, %s326
        %v328 = vld [vmem:[%s1] sm:$0xff]
        %v329 = vld [vmem:[%s1 + $0x8] sm:$0xff]
        %v330 = vld [vmem:[%s1 + $0x10] sm:$0xff]
        %v331 = vld [vmem:[%s1 + $0x18] sm:$0xff]
        %v332 = vld [vmem:[%s1 + $0x20] sm:$0xff]
        %v333 = vld [vmem:[%s1 + $0x28] sm:$0xff]
        %v334 = vld [vmem:[%s1 + $0x30] sm:$0xff]
        %v335 = vld [vmem:[%s1 + $0x38] sm:$0xff]
        %v336 = vld [vmem:[%s1 + $0x40] sm:$0xff]
        %v337 = vld [vmem:[%s1 + $0x48] sm:$0xff]
        %v338 = vld [vmem:[%s1 + $0x50] sm:$0xff]
        %v339 = vld [vmem:[%s1 + $0x58] sm:$0xff]
        %v340 = vld [vmem:[%s1 + $0x60] sm:$0xff]
        %v341 = vld [vmem:[%s1 + $0x68] sm:$0xff]
        %v342 = vld [vmem:[%s1 + $0x70] sm:$0xff]
        %v343 = vld [vmem:[%s1 + $0x78] sm:$0xff]
        %v344 = vld [vmem:[%s327] sm:$0x7]
        %v345 = vld [vmem:[%s2] sm:$0xff]
        %v346 = vld [vmem:[%s2 + $0x8] sm:$0xff]
        %v347 = vld [vmem:[%s2 + $0x10] sm:$0xff]
        %v348 = vld [vmem:[%s2 + $0x18] sm:$0xff]
        %v349 = vld [vmem:[%s2 + $0x20] sm:$0xff]
        %v350 = vld [vmem:[%s2 + $0x28] sm:$0xff]
        %v351 = vld [vmem:[%s2 + $0x30] sm:$0xff]
        %v352 = vld [vmem:[%s2 + $0x38] sm:$0xff]
        %v353 = vld [vmem:[%s2 + $0x40] sm:$0xff]
        %v354 = vld [vmem:[%s2 + $0x48] sm:$0xff]
        %v355 = vld [vmem:[%s2 + $0x50] sm:$0xff]
        %v356 = vld [vmem:[%s2 + $0x58] sm:$0xff]
        %v357 = vld [vmem:[%s2 + $0x60] sm:$0xff]
        %v358 = vld [vmem:[%s2 + $0x68] sm:$0xff]
        %v359 = vld [vmem:[%s2 + $0x70] sm:$0xff]
        %v360 = vld [vmem:[%s2 + $0x78] sm:$0xff]
        %362 = vset.pattern.permute.xlu0 0
        %363 = vperm.xlu0 %362, %v345
        %v364 = vpop.permute.xlu0 %363
        %367 = vset.pattern.permute.xlu0 0
        %368 = vperm.xlu0 %367, %v346
        %v369 = vpop.permute.xlu0 %368
        %372 = vset.pattern.permute.xlu0 0
        %373 = vperm.xlu0 %372, %v347
        %v374 = vpop.permute.xlu0 %373
        %377 = vset.pattern.permute.xlu0 0
        %378 = vperm.xlu0 %377, %v348
        %v379 = vpop.permute.xlu0 %378
        %382 = vset.pattern.permute.xlu0 0
        %383 = vperm.xlu0 %382, %v349
        %v384 = vpop.permute.xlu0 %383
        %387 = vset.pattern.permute.xlu0 0
        %388 = vperm.xlu0 %387, %v350
        %v389 = vpop.permute.xlu0 %388
        %392 = vset.pattern.permute.xlu0 0
        %393 = vperm.xlu0 %392, %v351
        %v394 = vpop.permute.xlu0 %393
        %397 = vset.pattern.permute.xlu0 0
        %398 = vperm.xlu0 %397, %v352
        %v399 = vpop.permute.xlu0 %398
        %402 = vset.pattern.permute.xlu0 0
        %403 = vperm.xlu0 %402, %v353
        %v404 = vpop.permute.xlu0 %403
        %407 = vset.pattern.permute.xlu0 0
        %408 = vperm.xlu0 %407, %v354
        %v409 = vpop.permute.xlu0 %408
        %412 = vset.pattern.permute.xlu0 0
        %413 = vperm.xlu0 %412, %v355
        %v414 = vpop.permute.xlu0 %413
        %417 = vset.pattern.permute.xlu0 0
        %418 = vperm.xlu0 %417, %v356
        %v419 = vpop.permute.xlu0 %418
        %422 = vset.pattern.permute.xlu0 0
        %423 = vperm.xlu0 %422, %v357
        %v424 = vpop.permute.xlu0 %423
        %427 = vset.pattern.permute.xlu0 0
        %428 = vperm.xlu0 %427, %v358
        %v429 = vpop.permute.xlu0 %428
        %432 = vset.pattern.permute.xlu0 0
        %433 = vperm.xlu0 %432, %v359
        %v434 = vpop.permute.xlu0 %433
        %437 = vset.pattern.permute.xlu0 0
        %438 = vperm.xlu0 %437, %v360
        %v439 = vpop.permute.xlu0 %438
        %vm441 = vcmask 23552
        %v443 = vsel %vm441, %v328, 0
        %v446 = vsel %vm441, %v329, 0
        %v449 = vsel %vm441, %v330, 0
        %v452 = vsel %vm441, %v331, 0
        %v455 = vsel %vm441, %v332, 0
        %v458 = vsel %vm441, %v333, 0
        %v461 = vsel %vm441, %v334, 0
        %v464 = vsel %vm441, %v335, 0
        %v467 = vsel %vm441, %v336, 0
        %v470 = vsel %vm441, %v337, 0
        %v473 = vsel %vm441, %v338, 0
        %v476 = vsel %vm441, %v339, 0
        %v479 = vsel %vm441, %v340, 0
        %v482 = vsel %vm441, %v341, 0
        %v485 = vsel %vm441, %v342, 0
        %v488 = vsel %vm441, %v343, 0
        %vm490 = vcmask 1042432
        %v492 = vsel %vm490, %v344, 0
        %494 = vmatprep.subr.mxu0 0.0
        %495 = vmatpush1.msra.mxu0 %v492
        %496 = vmatprep.subr.mxu0 0.0
        %497 = vmatpush1.msra.mxu0 0.0
        %498 = vmatprep.subr.mxu0 0.0
        %499 = vmatpush1.msra.mxu0 0.0
        %500 = vmatprep.subr.mxu0 0.0
        %501 = vmatpush1.msra.mxu0 0.0
        %502 = vmatprep.subr.mxu0 0.0
        %503 = vmatpush1.msra.mxu0 0.0
        %504 = vmatprep.subr.mxu0 0.0
        %505 = vmatpush1.msra.mxu0 0.0
        %506 = vmatprep.subr.mxu0 0.0
        %507 = vmatpush1.msra.mxu0 0.0
        %508 = vmatprep.subr.mxu0 0.0
        %509 = vmatpush1.msra.mxu0 0.0
        %510 = vmatprep.subr.mxu0 0.0
        %511 = vmatpush1.msra.mxu0 0.0
        %512 = vmatprep.subr.mxu0 0.0
        %513 = vmatpush1.msra.mxu0 0.0
        %514 = vmatprep.subr.mxu0 0.0
        %515 = vmatpush1.msra.mxu0 0.0
        %516 = vmatprep.subr.mxu0 0.0
        %517 = vmatpush1.msra.mxu0 0.0
        %518 = vmatprep.subr.mxu0 0.0
        %519 = vmatpush1.msra.mxu0 0.0
        %520 = vmatprep.subr.mxu0 0.0
        %521 = vmatpush1.msra.mxu0 0.0
        %522 = vmatprep.subr.mxu0 0.0
        %523 = vmatpush1.msra.mxu0 0.0
        %524 = vmatprep.subr.mxu0 0.0
        %525 = vmatpush1.msra.mxu0 0.0
        %526 = vmatprep.subr.mxu0 0.0
        %527 = vmatpush1.msra.mxu0 0.0
        %528 = vmatprep.subr.mxu0 0.0
        %529 = vmatpush1.msra.mxu0 0.0
        %530 = vmatprep.subr.mxu0 0.0
        %531 = vmatpush1.msra.mxu0 0.0
        %532 = vmatprep.subr.mxu0 0.0
        %533 = vmatpush1.msra.mxu0 0.0
        %534 = vmatprep.subr.mxu0 0.0
        %535 = vmatpush1.msra.mxu0 0.0
        %536 = vmatprep.subr.mxu0 0.0
        %537 = vmatpush1.msra.mxu0 0.0
        %538 = vmatprep.subr.mxu0 0.0
        %539 = vmatpush1.msra.mxu0 0.0
        %540 = vmatprep.subr.mxu0 0.0
        %541 = vmatpush1.msra.mxu0 0.0
        %542 = vmatprep.subr.mxu0 0.0
        %543 = vmatpush1.msra.mxu0 0.0
        %544 = vmatprep.subr.mxu0 0.0
        %545 = vmatpush1.msra.mxu0 0.0
        %546 = vmatprep.subr.mxu0 0.0
        %547 = vmatpush1.msra.mxu0 0.0
        %548 = vmatprep.subr.mxu0 0.0
        %549 = vmatpush1.msra.mxu0 0.0
        %550 = vmatprep.subr.mxu0 0.0
        %551 = vmatpush1.msra.mxu0 0.0
        %552 = vmatprep.subr.mxu0 0.0
        %553 = vmatpush1.msra.mxu0 0.0
        %554 = vmatprep.subr.mxu0 0.0
        %555 = vmatpush1.msra.mxu0 0.0
        %556 = vmatprep.subr.mxu0 0.0
        %557 = vmatpush1.msra.mxu0 0.0
        %558 = vmatprep.mubr.f32.mxu0 0.0
        %559 = vmatmul.mubr.f32.gmra.mrb[0].mxu0 %v443
        %v560 = vpop.f32.mrb[0].mxu0
        %v561 = vadd.f32 %v364, %v560
        %v562 = vpop.f32.mrb[0].mxu0
        %563 = vmatprep.mubr.f32.mxu0 0.0
        %564 = vmatmul.mubr.f32.gmra.mrb[0].mxu0 %v446
        %v565 = vpop.f32.mrb[0].mxu0
        %v566 = vadd.f32 %v369, %v565
        %v567 = vpop.f32.mrb[0].mxu0
        %568 = vmatprep.mubr.f32.mxu0 0.0
        %569 = vmatmul.mubr.f32.gmra.mrb[0].mxu0 %v449
        %v570 = vpop.f32.mrb[0].mxu0
        %v571 = vadd.f32 %v374, %v570
        %v572 = vpop.f32.mrb[0].mxu0
        %573 = vmatprep.mubr.f32.mxu0 0.0
        %574 = vmatmul.mubr.f32.gmra.mrb[0].mxu0 %v452
        %v575 = vpop.f32.mrb[0].mxu0
        %v576 = vadd.f32 %v379, %v575
        %v577 = vpop.f32.mrb[0].mxu0
        %578 = vmatprep.mubr.f32.mxu0 0.0
        %579 = vmatmul.mubr.f32.gmra.mrb[0].mxu0 %v455
        %v580 = vpop.f32.mrb[0].mxu0
        %v581 = vadd.f32 %v384, %v580
        %v582 = vpop.f32.mrb[0].mxu0
        %583 = vmatprep.mubr.f32.mxu0 0.0
        %584 = vmatmul.mubr.f32.gmra.mrb[0].mxu0 %v458
        %v585 = vpop.f32.mrb[0].mxu0
        %v586 = vadd.f32 %v389, %v585
        %v587 = vpop.f32.mrb[0].mxu0
        %588 = vmatprep.mubr.f32.mxu0 0.0
        %589 = vmatmul.mubr.f32.gmra.mrb[0].mxu0 %v461
        %v590 = vpop.f32.mrb[0].mxu0
        %v591 = vadd.f32 %v394, %v590
        %v592 = vpop.f32.mrb[0].mxu0
        %593 = vmatprep.mubr.f32.mxu0 0.0
        %594 = vmatmul.mubr.f32.gmra.mrb[0].mxu0 %v464
        %v595 = vpop.f32.mrb[0].mxu0
        %v596 = vadd.f32 %v399, %v595
        %v597 = vpop.f32.mrb[0].mxu0
        %598 = vmatprep.mubr.f32.mxu0 0.0
        %599 = vmatmul.mubr.f32.gmra.mrb[0].mxu0 %v467
        %v600 = vpop.f32.mrb[0].mxu0
        %v601 = vadd.f32 %v404, %v600
        %v602 = vpop.f32.mrb[0].mxu0
        %603 = vmatprep.mubr.f32.mxu0 0.0
        %604 = vmatmul.mubr.f32.gmra.mrb[0].mxu0 %v470
        %v605 = vpop.f32.mrb[0].mxu0
        %v606 = vadd.f32 %v409, %v605
        %v607 = vpop.f32.mrb[0].mxu0
        %608 = vmatprep.mubr.f32.mxu0 0.0
        %609 = vmatmul.mubr.f32.gmra.mrb[0].mxu0 %v473
        %v610 = vpop.f32.mrb[0].mxu0
        %v611 = vadd.f32 %v414, %v610
        %v612 = vpop.f32.mrb[0].mxu0
        %613 = vmatprep.mubr.f32.mxu0 0.0
        %614 = vmatmul.mubr.f32.gmra.mrb[0].mxu0 %v476
        %v615 = vpop.f32.mrb[0].mxu0
        %v616 = vadd.f32 %v419, %v615
        %v617 = vpop.f32.mrb[0].mxu0
        %618 = vmatprep.mubr.f32.mxu0 0.0
        %619 = vmatmul.mubr.f32.gmra.mrb[0].mxu0 %v479
        %v620 = vpop.f32.mrb[0].mxu0
        %v621 = vadd.f32 %v424, %v620
        %v622 = vpop.f32.mrb[0].mxu0
        %623 = vmatprep.mubr.f32.mxu0 0.0
        %624 = vmatmul.mubr.f32.gmra.mrb[0].mxu0 %v482
        %v625 = vpop.f32.mrb[0].mxu0
        %v626 = vadd.f32 %v429, %v625
        %v627 = vpop.f32.mrb[0].mxu0
        %628 = vmatprep.mubr.f32.mxu0 0.0
        %629 = vmatmul.mubr.f32.gmra.mrb[0].mxu0 %v485
        %v630 = vpop.f32.mrb[0].mxu0
        %v631 = vadd.f32 %v434, %v630
        %v632 = vpop.f32.mrb[0].mxu0
        %633 = vmatprep.mubr.f32.mxu0 0.0
        %634 = vmatmul.mubr.f32.gmra.mrb[0].mxu0 %v488
        %v635 = vpop.f32.mrb[0].mxu0
        %v636 = vadd.f32 %v439, %v635
        %v637 = vpop.f32.mrb[0].mxu0
        %638 = vdwg.mxu0
        %v639 = vmax.f32 %v561, 0.0
        %v640 = vmax.f32 %v566, 0.0
        %v641 = vmax.f32 %v571, 0.0
        %v642 = vmax.f32 %v576, 0.0
        %v643 = vmax.f32 %v581, 0.0
        %v644 = vmax.f32 %v586, 0.0
        %v645 = vmax.f32 %v591, 0.0
        %v646 = vmax.f32 %v596, 0.0
        %v647 = vmax.f32 %v601, 0.0
        %v648 = vmax.f32 %v606, 0.0
        %v649 = vmax.f32 %v611, 0.0
        %v650 = vmax.f32 %v616, 0.0
        %v651 = vmax.f32 %v621, 0.0
        %v652 = vmax.f32 %v626, 0.0
        %v653 = vmax.f32 %v631, 0.0
        %v654 = vmax.f32 %v636, 0.0
        %v655 = vld [vmem:[%s3] sm:$0xff]
        %v656 = vld [vmem:[%s3 + $0x8] sm:$0xff]
        %v657 = vld [vmem:[%s3 + $0x10] sm:$0xff]
        %v658 = vld [vmem:[%s3 + $0x18] sm:$0xff]
        %v659 = vld [vmem:[%s3 + $0x20] sm:$0xff]
        %v660 = vld [vmem:[%s3 + $0x28] sm:$0xff]
        %v661 = vld [vmem:[%s3 + $0x30] sm:$0xff]
        %v662 = vld [vmem:[%s3 + $0x38] sm:$0xff]
        %v663 = vld [vmem:[%s4] sm:$0xff]
        %v664 = vld [vmem:[%s4 + $0x8] sm:$0xff]
        %v665 = vld [vmem:[%s4 + $0x10] sm:$0xff]
        %v666 = vld [vmem:[%s4 + $0x18] sm:$0xff]
        %v667 = vld [vmem:[%s4 + $0x20] sm:$0xff]
        %v668 = vld [vmem:[%s4 + $0x28] sm:$0xff]
        %v669 = vld [vmem:[%s4 + $0x30] sm:$0xff]
        %v670 = vld [vmem:[%s4 + $0x38] sm:$0xff]
        %672 = vset.pattern.permute.xlu0 0
        %673 = vperm.xlu0 %672, %v663
        %v674 = vpop.permute.xlu0 %673
        %677 = vset.pattern.permute.xlu0 0
        %678 = vperm.xlu0 %677, %v664
        %v679 = vpop.permute.xlu0 %678
        %682 = vset.pattern.permute.xlu0 0
        %683 = vperm.xlu0 %682, %v665
        %v684 = vpop.permute.xlu0 %683
        %687 = vset.pattern.permute.xlu0 0
        %688 = vperm.xlu0 %687, %v666
        %v689 = vpop.permute.xlu0 %688
        %692 = vset.pattern.permute.xlu0 0
        %693 = vperm.xlu0 %692, %v667
        %v694 = vpop.permute.xlu0 %693
        %697 = vset.pattern.permute.xlu0 0
        %698 = vperm.xlu0 %697, %v668
        %v699 = vpop.permute.xlu0 %698
        %702 = vset.pattern.permute.xlu0 0
        %703 = vperm.xlu0 %702, %v669
        %v704 = vpop.permute.xlu0 %703
        %707 = vset.pattern.permute.xlu0 0
        %708 = vperm.xlu0 %707, %v670
        %v709 = vpop.permute.xlu0 %708
        %711 = vmatprep.subr.mxu0 0.0
        %712 = vmatpush1.msra.mxu0 %v639
        %713 = vmatprep.subr.mxu0 0.0
        %714 = vmatpush1.msra.mxu0 %v640
        %715 = vmatprep.subr.mxu0 0.0
        %716 = vmatpush1.msra.mxu0 %v641
        %717 = vmatprep.subr.mxu0 0.0
        %718 = vmatpush1.msra.mxu0 %v642
        %719 = vmatprep.subr.mxu0 0.0
        %720 = vmatpush1.msra.mxu0 %v643
        %721 = vmatprep.subr.mxu0 0.0
        %722 = vmatpush1.msra.mxu0 %v644
        %723 = vmatprep.subr.mxu0 0.0
        %724 = vmatpush1.msra.mxu0 %v645
        %725 = vmatprep.subr.mxu0 0.0
        %726 = vmatpush1.msra.mxu0 %v646
        %727 = vmatprep.subr.mxu0 0.0
        %728 = vmatpush1.msra.mxu0 %v647
        %729 = vmatprep.subr.mxu0 0.0
        %730 = vmatpush1.msra.mxu0 %v648
        %731 = vmatprep.subr.mxu0 0.0
        %732 = vmatpush1.msra.mxu0 %v649
        %733 = vmatprep.subr.mxu0 0.0
        %734 = vmatpush1.msra.mxu0 %v650
        %735 = vmatprep.subr.mxu0 0.0
        %736 = vmatpush1.msra.mxu0 %v651
        %737 = vmatprep.subr.mxu0 0.0
        %738 = vmatpush1.msra.mxu0 %v652
        %739 = vmatprep.subr.mxu0 0.0
        %740 = vmatpush1.msra.mxu0 %v653
        %741 = vmatprep.subr.mxu0 0.0
        %742 = vmatpush1.msra.mxu0 %v654
        %743 = vmatprep.subr.mxu0 0.0
        %744 = vmatpush1.msra.mxu0 0.0
        %745 = vmatprep.subr.mxu0 0.0
        %746 = vmatpush1.msra.mxu0 0.0
        %747 = vmatprep.subr.mxu0 0.0
        %748 = vmatpush1.msra.mxu0 0.0
        %749 = vmatprep.subr.mxu0 0.0
        %750 = vmatpush1.msra.mxu0 0.0
        %751 = vmatprep.subr.mxu0 0.0
        %752 = vmatpush1.msra.mxu0 0.0
        %753 = vmatprep.subr.mxu0 0.0
        %754 = vmatpush1.msra.mxu0 0.0
        %755 = vmatprep.subr.mxu0 0.0
        %756 = vmatpush1.msra.mxu0 0.0
        %757 = vmatprep.subr.mxu0 0.0
        %758 = vmatpush1.msra.mxu0 0.0
        %759 = vmatprep.subr.mxu0 0.0
        %760 = vmatpush1.msra.mxu0 0.0
        %761 = vmatprep.subr.mxu0 0.0
        %762 = vmatpush1.msra.mxu0 0.0
        %763 = vmatprep.subr.mxu0 0.0
        %764 = vmatpush1.msra.mxu0 0.0
        %765 = vmatprep.subr.mxu0 0.0
        %766 = vmatpush1.msra.mxu0 0.0
        %767 = vmatprep.subr.mxu0 0.0
        %768 = vmatpush1.msra.mxu0 0.0
        %769 = vmatprep.subr.mxu0 0.0
        %770 = vmatpush1.msra.mxu0 0.0
        %771 = vmatprep.subr.mxu0 0.0
        %772 = vmatpush1.msra.mxu0 0.0
        %773 = vmatprep.subr.mxu0 0.0
        %774 = vmatpush1.msra.mxu0 0.0
        %775 = vmatprep.mubr.f32.mxu0 0.0
        %776 = vmatmul.mubr.f32.gmra.mrb[0].mxu0 %v655
        %v777 = vpop.f32.mrb[0].mxu0
        %v778 = vadd.f32 %v674, %v777
        %v779 = vpop.f32.mrb[0].mxu0
        %780 = vmatprep.mubr.f32.mxu0 0.0
        %781 = vmatmul.mubr.f32.gmra.mrb[0].mxu0 %v656
        %v782 = vpop.f32.mrb[0].mxu0
        %v783 = vadd.f32 %v679, %v782
        %v784 = vpop.f32.mrb[0].mxu0
        %785 = vmatprep.mubr.f32.mxu0 0.0
        %786 = vmatmul.mubr.f32.gmra.mrb[0].mxu0 %v657
        %v787 = vpop.f32.mrb[0].mxu0
        %v788 = vadd.f32 %v684, %v787
        %v789 = vpop.f32.mrb[0].mxu0
        %790 = vmatprep.mubr.f32.mxu0 0.0
        %791 = vmatmul.mubr.f32.gmra.mrb[0].mxu0 %v658
        %v792 = vpop.f32.mrb[0].mxu0
        %v793 = vadd.f32 %v689, %v792
        %v794 = vpop.f32.mrb[0].mxu0
        %795 = vmatprep.mubr.f32.mxu0 0.0
        %796 = vmatmul.mubr.f32.gmra.mrb[0].mxu0 %v659
        %v797 = vpop.f32.mrb[0].mxu0
        %v798 = vadd.f32 %v694, %v797
        %v799 = vpop.f32.mrb[0].mxu0
        %800 = vmatprep.mubr.f32.mxu0 0.0
        %801 = vmatmul.mubr.f32.gmra.mrb[0].mxu0 %v660
        %v802 = vpop.f32.mrb[0].mxu0
        %v803 = vadd.f32 %v699, %v802
        %v804 = vpop.f32.mrb[0].mxu0
        %805 = vmatprep.mubr.f32.mxu0 0.0
        %806 = vmatmul.mubr.f32.gmra.mrb[0].mxu0 %v661
        %v807 = vpop.f32.mrb[0].mxu0
        %v808 = vadd.f32 %v704, %v807
        %v809 = vpop.f32.mrb[0].mxu0
        %810 = vmatprep.mubr.f32.mxu0 0.0
        %811 = vmatmul.mubr.f32.gmra.mrb[0].mxu0 %v662
        %v812 = vpop.f32.mrb[0].mxu0
        %v813 = vadd.f32 %v709, %v812
        %v814 = vpop.f32.mrb[0].mxu0
        %815 = vdwg.mxu0
        %v816 = vmax.f32 %v778, 0.0
        %v817 = vmax.f32 %v783, 0.0
        %v818 = vmax.f32 %v788, 0.0
        %v819 = vmax.f32 %v793, 0.0
        %v820 = vmax.f32 %v798, 0.0
        %v821 = vmax.f32 %v803, 0.0
        %v822 = vmax.f32 %v808, 0.0
        %v823 = vmax.f32 %v813, 0.0
        %v824 = vld [vmem:[%s5] sm:$0xff]
        %v825 = vld [vmem:[%s5 + $0x8] sm:$0xff]
        %v826 = vld [vmem:[%s5 + $0x10] sm:$0xff]
        %v827 = vld [vmem:[%s5 + $0x18] sm:$0xff]
        %v828 = vld [vmem:[%s5 + $0x20] sm:$0xff]
        %v829 = vld [vmem:[%s5 + $0x28] sm:$0xff]
        %v830 = vld [vmem:[%s5 + $0x30] sm:$0xff]
        %v831 = vld [vmem:[%s5 + $0x38] sm:$0xff]
        %v832 = vld [vmem:[%s5 + $0x40] sm:$0xff]
        %v833 = vld [vmem:[%s5 + $0x48] sm:$0xff]
        %v834 = vld [vmem:[%s5 + $0x50] sm:$0xff]
        %v835 = vld [vmem:[%s5 + $0x58] sm:$0xff]
        %v836 = vld [vmem:[%s5 + $0x60] sm:$0xff]
        %v837 = vld [vmem:[%s5 + $0x68] sm:$0xff]
        %v838 = vld [vmem:[%s5 + $0x70] sm:$0xff]
        %v839 = vld [vmem:[%s5 + $0x78] sm:$0xff]
        %v840 = vld [vmem:[%s6] sm:$0xff]
        %v841 = vld [vmem:[%s6 + $0x8] sm:$0xff]
        %v842 = vld [vmem:[%s6 + $0x10] sm:$0xff]
        %v843 = vld [vmem:[%s6 + $0x18] sm:$0xff]
        %v844 = vld [vmem:[%s6 + $0x20] sm:$0xff]
        %v845 = vld [vmem:[%s6 + $0x28] sm:$0xff]
        %v846 = vld [vmem:[%s6 + $0x30] sm:$0xff]
        %v847 = vld [vmem:[%s6 + $0x38] sm:$0xff]
        %v848 = vld [vmem:[%s6 + $0x40] sm:$0xff]
        %v849 = vld [vmem:[%s6 + $0x48] sm:$0xff]
        %v850 = vld [vmem:[%s6 + $0x50] sm:$0xff]
        %v851 = vld [vmem:[%s6 + $0x58] sm:$0xff]
        %v852 = vld [vmem:[%s6 + $0x60] sm:$0xff]
        %v853 = vld [vmem:[%s6 + $0x68] sm:$0xff]
        %v854 = vld [vmem:[%s6 + $0x70] sm:$0xff]
        %v855 = vld [vmem:[%s6 + $0x78] sm:$0xff]
        %857 = vset.pattern.permute.xlu0 0
        %858 = vperm.xlu0 %857, %v840
        %v859 = vpop.permute.xlu0 %858
        %862 = vset.pattern.permute.xlu0 0
        %863 = vperm.xlu0 %862, %v841
        %v864 = vpop.permute.xlu0 %863
        %867 = vset.pattern.permute.xlu0 0
        %868 = vperm.xlu0 %867, %v842
        %v869 = vpop.permute.xlu0 %868
        %872 = vset.pattern.permute.xlu0 0
        %873 = vperm.xlu0 %872, %v843
        %v874 = vpop.permute.xlu0 %873
        %877 = vset.pattern.permute.xlu0 0
        %878 = vperm.xlu0 %877, %v844
        %v879 = vpop.permute.xlu0 %878
        %882 = vset.pattern.permute.xlu0 0
        %883 = vperm.xlu0 %882, %v845
        %v884 = vpop.permute.xlu0 %883
        %887 = vset.pattern.permute.xlu0 0
        %888 = vperm.xlu0 %887, %v846
        %v889 = vpop.permute.xlu0 %888
        %892 = vset.pattern.permute.xlu0 0
        %893 = vperm.xlu0 %892, %v847
        %v894 = vpop.permute.xlu0 %893
        %897 = vset.pattern.permute.xlu0 0
        %898 = vperm.xlu0 %897, %v848
        %v899 = vpop.permute.xlu0 %898
        %902 = vset.pattern.permute.xlu0 0
        %903 = vperm.xlu0 %902, %v849
        %v904 = vpop.permute.xlu0 %903
        %907 = vset.pattern.permute.xlu0 0
        %908 = vperm.xlu0 %907, %v850
        %v909 = vpop.permute.xlu0 %908
        %912 = vset.pattern.permute.xlu0 0
        %913 = vperm.xlu0 %912, %v851
        %v914 = vpop.permute.xlu0 %913
        %917 = vset.pattern.permute.xlu0 0
        %918 = vperm.xlu0 %917, %v852
        %v919 = vpop.permute.xlu0 %918
        %922 = vset.pattern.permute.xlu0 0
        %923 = vperm.xlu0 %922, %v853
        %v924 = vpop.permute.xlu0 %923
        %927 = vset.pattern.permute.xlu0 0
        %928 = vperm.xlu0 %927, %v854
        %v929 = vpop.permute.xlu0 %928
        %932 = vset.pattern.permute.xlu0 0
        %933 = vperm.xlu0 %932, %v855
        %v934 = vpop.permute.xlu0 %933
        %vm936 = vcmask 523264
        %v938 = vsel %vm936, %v824, 0
        %v941 = vsel %vm936, %v825, 0
        %v944 = vsel %vm936, %v826, 0
        %v947 = vsel %vm936, %v827, 0
        %v950 = vsel %vm936, %v828, 0
        %v953 = vsel %vm936, %v829, 0
        %v956 = vsel %vm936, %v830, 0
        %v959 = vsel %vm936, %v831, 0
        %v962 = vsel %vm936, %v832, 0
        %v965 = vsel %vm936, %v833, 0
        %v968 = vsel %vm936, %v834, 0
        %v971 = vsel %vm936, %v835, 0
        %v974 = vsel %vm936, %v836, 0
        %v977 = vsel %vm936, %v837, 0
        %v980 = vsel %vm936, %v838, 0
        %v983 = vsel %vm936, %v839, 0
        %985 = vmatprep.subr.mxu0 0.0
        %986 = vmatpush1.msra.mxu0 %v816
        %987 = vmatprep.subr.mxu0 0.0
        %988 = vmatpush1.msra.mxu0 %v817
        %989 = vmatprep.subr.mxu0 0.0
        %990 = vmatpush1.msra.mxu0 %v818
        %991 = vmatprep.subr.mxu0 0.0
        %992 = vmatpush1.msra.mxu0 %v819
        %993 = vmatprep.subr.mxu0 0.0
        %994 = vmatpush1.msra.mxu0 %v820
        %995 = vmatprep.subr.mxu0 0.0
        %996 = vmatpush1.msra.mxu0 %v821
        %997 = vmatprep.subr.mxu0 0.0
        %998 = vmatpush1.msra.mxu0 %v822
        %999 = vmatprep.subr.mxu0 0.0
        %1000 = vmatpush1.msra.mxu0 %v823
        %1001 = vmatprep.subr.mxu0 0.0
        %1002 = vmatpush1.msra.mxu0 0.0
        %1003 = vmatprep.subr.mxu0 0.0
        %1004 = vmatpush1.msra.mxu0 0.0
        %1005 = vmatprep.subr.mxu0 0.0
        %1006 = vmatpush1.msra.mxu0 0.0
        %1007 = vmatprep.subr.mxu0 0.0
        %1008 = vmatpush1.msra.mxu0 0.0
        %1009 = vmatprep.subr.mxu0 0.0
        %1010 = vmatpush1.msra.mxu0 0.0
        %1011 = vmatprep.subr.mxu0 0.0
        %1012 = vmatpush1.msra.mxu0 0.0
        %1013 = vmatprep.subr.mxu0 0.0
        %1014 = vmatpush1.msra.mxu0 0.0
        %1015 = vmatprep.subr.mxu0 0.0
        %1016 = vmatpush1.msra.mxu0 0.0
        %1017 = vmatprep.subr.mxu0 0.0
        %1018 = vmatpush1.msra.mxu0 0.0
        %1019 = vmatprep.subr.mxu0 0.0
        %1020 = vmatpush1.msra.mxu0 0.0
        %1021 = vmatprep.subr.mxu0 0.0
        %1022 = vmatpush1.msra.mxu0 0.0
        %1023 = vmatprep.subr.mxu0 0.0
        %1024 = vmatpush1.msra.mxu0 0.0
        %1025 = vmatprep.subr.mxu0 0.0
        %1026 = vmatpush1.msra.mxu0 0.0
        %1027 = vmatprep.subr.mxu0 0.0
        %1028 = vmatpush1.msra.mxu0 0.0
        %1029 = vmatprep.subr.mxu0 0.0
        %1030 = vmatpush1.msra.mxu0 0.0
        %1031 = vmatprep.subr.mxu0 0.0
        %1032 = vmatpush1.msra.mxu0 0.0
        %1033 = vmatprep.subr.mxu0 0.0
        %1034 = vmatpush1.msra.mxu0 0.0
        %1035 = vmatprep.subr.mxu0 0.0
        %1036 = vmatpush1.msra.mxu0 0.0
        %1037 = vmatprep.subr.mxu0 0.0
        %1038 = vmatpush1.msra.mxu0 0.0
        %1039 = vmatprep.subr.mxu0 0.0
        %1040 = vmatpush1.msra.mxu0 0.0
        %1041 = vmatprep.subr.mxu0 0.0
        %1042 = vmatpush1.msra.mxu0 0.0
        %1043 = vmatprep.subr.mxu0 0.0
        %1044 = vmatpush1.msra.mxu0 0.0
        %1045 = vmatprep.subr.mxu0 0.0
        %1046 = vmatpush1.msra.mxu0 0.0
        %1047 = vmatprep.subr.mxu0 0.0
        %1048 = vmatpush1.msra.mxu0 0.0
        %1049 = vmatprep.mubr.f32.mxu0 0.0
        %1050 = vmatmul.mubr.f32.gmra.mrb[0].mxu0 %v938
        %v1051 = vpop.f32.mrb[0].mxu0
        %v1052 = vadd.f32 %v859, %v1051
        %v1053 = vpop.f32.mrb[0].mxu0
        %1054 = vmatprep.mubr.f32.mxu0 0.0
        %1055 = vmatmul.mubr.f32.gmra.mrb[0].mxu0 %v941
        %v1056 = vpop.f32.mrb[0].mxu0
        %v1057 = vadd.f32 %v864, %v1056
        %v1058 = vpop.f32.mrb[0].mxu0
        %1059 = vmatprep.mubr.f32.mxu0 0.0
        %1060 = vmatmul.mubr.f32.gmra.mrb[0].mxu0 %v944
        %v1061 = vpop.f32.mrb[0].mxu0
        %v1062 = vadd.f32 %v869, %v1061
        %v1063 = vpop.f32.mrb[0].mxu0
        %1064 = vmatprep.mubr.f32.mxu0 0.0
        %1065 = vmatmul.mubr.f32.gmra.mrb[0].mxu0 %v947
        %v1066 = vpop.f32.mrb[0].mxu0
        %v1067 = vadd.f32 %v874, %v1066
        %v1068 = vpop.f32.mrb[0].mxu0
        %1069 = vmatprep.mubr.f32.mxu0 0.0
        %1070 = vmatmul.mubr.f32.gmra.mrb[0].mxu0 %v950
        %v1071 = vpop.f32.mrb[0].mxu0
        %v1072 = vadd.f32 %v879, %v1071
        %v1073 = vpop.f32.mrb[0].mxu0
        %1074 = vmatprep.mubr.f32.mxu0 0.0
        %1075 = vmatmul.mubr.f32.gmra.mrb[0].mxu0 %v953
        %v1076 = vpop.f32.mrb[0].mxu0
        %v1077 = vadd.f32 %v884, %v1076
        %v1078 = vpop.f32.mrb[0].mxu0
        %1079 = vmatprep.mubr.f32.mxu0 0.0
        %1080 = vmatmul.mubr.f32.gmra.mrb[0].mxu0 %v956
        %v1081 = vpop.f32.mrb[0].mxu0
        %v1082 = vadd.f32 %v889, %v1081
        %v1083 = vpop.f32.mrb[0].mxu0
        %1084 = vmatprep.mubr.f32.mxu0 0.0
        %1085 = vmatmul.mubr.f32.gmra.mrb[0].mxu0 %v959
        %v1086 = vpop.f32.mrb[0].mxu0
        %v1087 = vadd.f32 %v894, %v1086
        %v1088 = vpop.f32.mrb[0].mxu0
        %1089 = vmatprep.mubr.f32.mxu0 0.0
        %1090 = vmatmul.mubr.f32.gmra.mrb[0].mxu0 %v962
        %v1091 = vpop.f32.mrb[0].mxu0
        %v1092 = vadd.f32 %v899, %v1091
        %v1093 = vpop.f32.mrb[0].mxu0
        %1094 = vmatprep.mubr.f32.mxu0 0.0
        %1095 = vmatmul.mubr.f32.gmra.mrb[0].mxu0 %v965
        %v1096 = vpop.f32.mrb[0].mxu0
        %v1097 = vadd.f32 %v904, %v1096
        %v1098 = vpop.f32.mrb[0].mxu0
        %1099 = vmatprep.mubr.f32.mxu0 0.0
        %1100 = vmatmul.mubr.f32.gmra.mrb[0].mxu0 %v968
        %v1101 = vpop.f32.mrb[0].mxu0
        %v1102 = vadd.f32 %v909, %v1101
        %v1103 = vpop.f32.mrb[0].mxu0
        %1104 = vmatprep.mubr.f32.mxu0 0.0
        %1105 = vmatmul.mubr.f32.gmra.mrb[0].mxu0 %v971
        %v1106 = vpop.f32.mrb[0].mxu0
        %v1107 = vadd.f32 %v914, %v1106
        %v1108 = vpop.f32.mrb[0].mxu0
        %1109 = vmatprep.mubr.f32.mxu0 0.0
        %1110 = vmatmul.mubr.f32.gmra.mrb[0].mxu0 %v974
        %v1111 = vpop.f32.mrb[0].mxu0
        %v1112 = vadd.f32 %v919, %v1111
        %v1113 = vpop.f32.mrb[0].mxu0
        %1114 = vmatprep.mubr.f32.mxu0 0.0
        %1115 = vmatmul.mubr.f32.gmra.mrb[0].mxu0 %v977
        %v1116 = vpop.f32.mrb[0].mxu0
        %v1117 = vadd.f32 %v924, %v1116
        %v1118 = vpop.f32.mrb[0].mxu0
        %1119 = vmatprep.mubr.f32.mxu0 0.0
        %1120 = vmatmul.mubr.f32.gmra.mrb[0].mxu0 %v980
        %v1121 = vpop.f32.mrb[0].mxu0
        %v1122 = vadd.f32 %v929, %v1121
        %v1123 = vpop.f32.mrb[0].mxu0
        %1124 = vmatprep.mubr.f32.mxu0 0.0
        %1125 = vmatmul.mubr.f32.gmra.mrb[0].mxu0 %v983
        %v1126 = vpop.f32.mrb[0].mxu0
        %v1127 = vadd.f32 %v934, %v1126
        %v1128 = vpop.f32.mrb[0].mxu0
        %1129 = vdwg.mxu0
        %v1130 = vmax.f32 %v1052, 0.0
        %v1131 = vmax.f32 %v1057, 0.0
        %v1132 = vmax.f32 %v1062, 0.0
        %v1133 = vmax.f32 %v1067, 0.0
        %v1134 = vmax.f32 %v1072, 0.0
        %v1135 = vmax.f32 %v1077, 0.0
        %v1136 = vmax.f32 %v1082, 0.0
        %v1137 = vmax.f32 %v1087, 0.0
        %v1138 = vmax.f32 %v1092, 0.0
        %v1139 = vmax.f32 %v1097, 0.0
        %v1140 = vmax.f32 %v1102, 0.0
        %v1141 = vmax.f32 %v1107, 0.0
        %v1142 = vmax.f32 %v1112, 0.0
        %v1143 = vmax.f32 %v1117, 0.0
        %v1144 = vmax.f32 %v1122, 0.0
        %v1145 = vmax.f32 %v1127, 0.0
        %v1146 = vld [vmem:[%s7] sm:$0x7]
        %v1147 = vld [vmem:[%s8] sm:$0x7]
        %1149 = vset.pattern.permute.xlu0 0
        %1150 = vperm.xlu0 %1149, %v1147
        %v1151 = vpop.permute.xlu0 %1150
        %1153 = vmatprep.subr.mxu0 0.0
        %1154 = vmatpush1.msra.mxu0 %v1130
        %1155 = vmatprep.subr.mxu0 0.0
        %1156 = vmatpush1.msra.mxu0 %v1131
        %1157 = vmatprep.subr.mxu0 0.0
        %1158 = vmatpush1.msra.mxu0 %v1132
        %1159 = vmatprep.subr.mxu0 0.0
        %1160 = vmatpush1.msra.mxu0 %v1133
        %1161 = vmatprep.subr.mxu0 0.0
        %1162 = vmatpush1.msra.mxu0 %v1134
        %1163 = vmatprep.subr.mxu0 0.0
        %1164 = vmatpush1.msra.mxu0 %v1135
        %1165 = vmatprep.subr.mxu0 0.0
        %1166 = vmatpush1.msra.mxu0 %v1136
        %1167 = vmatprep.subr.mxu0 0.0
        %1168 = vmatpush1.msra.mxu0 %v1137
        %1169 = vmatprep.subr.mxu0 0.0
        %1170 = vmatpush1.msra.mxu0 %v1138
        %1171 = vmatprep.subr.mxu0 0.0
        %1172 = vmatpush1.msra.mxu0 %v1139
        %1173 = vmatprep.subr.mxu0 0.0
        %1174 = vmatpush1.msra.mxu0 %v1140
        %1175 = vmatprep.subr.mxu0 0.0
        %1176 = vmatpush1.msra.mxu0 %v1141
        %1177 = vmatprep.subr.mxu0 0.0
        %1178 = vmatpush1.msra.mxu0 %v1142
        %1179 = vmatprep.subr.mxu0 0.0
        %1180 = vmatpush1.msra.mxu0 %v1143
        %1181 = vmatprep.subr.mxu0 0.0
        %1182 = vmatpush1.msra.mxu0 %v1144
        %1183 = vmatprep.subr.mxu0 0.0
        %1184 = vmatpush1.msra.mxu0 %v1145
        %1185 = vmatprep.subr.mxu0 0.0
        %1186 = vmatpush1.msra.mxu0 0.0
        %1187 = vmatprep.subr.mxu0 0.0
        %1188 = vmatpush1.msra.mxu0 0.0
        %1189 = vmatprep.subr.mxu0 0.0
        %1190 = vmatpush1.msra.mxu0 0.0
        %1191 = vmatprep.subr.mxu0 0.0
        %1192 = vmatpush1.msra.mxu0 0.0
        %1193 = vmatprep.subr.mxu0 0.0
        %1194 = vmatpush1.msra.mxu0 0.0
        %1195 = vmatprep.subr.mxu0 0.0
        %1196 = vmatpush1.msra.mxu0 0.0
        %1197 = vmatprep.subr.mxu0 0.0
        %1198 = vmatpush1.msra.mxu0 0.0
        %1199 = vmatprep.subr.mxu0 0.0
        %1200 = vmatpush1.msra.mxu0 0.0
        %1201 = vmatprep.subr.mxu0 0.0
        %1202 = vmatpush1.msra.mxu0 0.0
        %1203 = vmatprep.subr.mxu0 0.0
        %1204 = vmatpush1.msra.mxu0 0.0
        %1205 = vmatprep.subr.mxu0 0.0
        %1206 = vmatpush1.msra.mxu0 0.0
        %1207 = vmatprep.subr.mxu0 0.0
        %1208 = vmatpush1.msra.mxu0 0.0
        %1209 = vmatprep.subr.mxu0 0.0
        %1210 = vmatpush1.msra.mxu0 0.0
        %1211 = vmatprep.subr.mxu0 0.0
        %1212 = vmatpush1.msra.mxu0 0.0
        %1213 = vmatprep.subr.mxu0 0.0
        %1214 = vmatpush1.msra.mxu0 0.0
        %1215 = vmatprep.subr.mxu0 0.0
        %1216 = vmatpush1.msra.mxu0 0.0
        %1217 = vmatprep.mubr.f32.mxu0 0.0
        %1218 = vmatmul.mubr.f32.gmra.mrb[0].mxu0 %v1146
        %v1219 = vpop.f32.mrb[0].mxu0
        %v1220 = vadd.f32 %v1151, %v1219
        %v1221 = vpop.f32.mrb[0].mxu0
        %1222 = vdwg.mxu0
        %1223 = vst [vmem:[%s323] sm:$0x7] %v1220
        %s1224 = sand.u32 %s225, 1
        %s1225 = scalar_lea.sflag [#allocation3], %s1224
        %s1226 = sand.u32 %s225, 1
        %s1227 = smul.addr %s1226, 4
        %s1228 = scalar_lea.vmem [#allocation2], %s1227
        // Predicated region
        $region57: #{tpu_custom_call.1} parent=55 // pred_check
          %p1229 = pneg %p235
        $region58: #{tpu_custom_call.1} parent=55 // pred_check_branch
          %1231 = sbr.rel (%p1229) target = $region60
        $region59: #{tpu_custom_call.1} parent=55 // pred_region
          %s1233 = ssub.s32 64, 64
          %1234 = vsyncadd %s1225, %s1233
          %s1235 = smul.addr %s23, 64
          %s1236 = scalar_lea.hbm %s9, %s1235
          %s1238 = sshll.u32 %s1228, 4
          %s1239 = int_to_ptr.vmem [resolvable:$true] %s1238
          %1241 = dma.vmem_to_hbm [thread:$0]  %s1239, 64, %s1236, %s1225
        $region60: #{tpu_custom_call.1} parent=55 // pred_fallthru
          _
      $region56: #{tpu_custom_call.1} parent=5 // pred_fallthru
        _
      %p1242 = scmp.le.s32.totalorder 2, %s18
      // Predicated region
      $region61: #{tpu_custom_call.1} parent=5 // pred_check
        %p1243 = pneg %p1242
      $region62: #{tpu_custom_call.1} parent=5 // pred_check_branch
        %1245 = sbr.rel (%p1243) target = $region64
      $region63: #{tpu_custom_call.1} parent=5 // pred_region
        %s1246 = ssub.s32 %s18, 2
        // Predicated region
        $region65: #{tpu_custom_call.1} parent=63 // pred_check
          %p1247 = pneg %p241
        $region66: #{tpu_custom_call.1} parent=63 // pred_check_branch
          %1249 = sbr.rel (%p1247) target = $region68
        $region67: #{tpu_custom_call.1} parent=63 // pred_region
          %s1250 = sand.u32 %s226, 1
          %s1251 = scalar_lea.sflag [#allocation3], %s1250
          %s1252 = sand.u32 %s226, 1
          %s1253 = smul.addr %s1252, 4
          %s1254 = scalar_lea.vmem [#allocation2], %s1253
          %1255 = dma.done %s1251, 64
        $region68: #{tpu_custom_call.1} parent=63 // pred_fallthru
          _
      $region64: #{tpu_custom_call.1} parent=5 // pred_fallthru
        _
    $region6: #{tpu_custom_call.1} parent=1 // loop_footer
      %s22 = sadd.s32 1, %s18
    $region7: #{tpu_custom_call.1} parent=1 // loop_footer_branch
      %17 = sbr.rel target = $region3
    $region8: #{tpu_custom_call.1} parent=1 // loop_exit
      _
    %1256 = vsyncpa [#allocation3], 1
    %s1257 = scalar_lea.sflag [#allocation3], 1
    %1258 = vsyncpa %s1257, 1

</llo_original>
